<compile_context>
chip_gen: v7x
topology: tpu7x:2x2x1
jax: 0.10.0
libtpu: 0.0.40
codegen_flags: <defaults>
</compile_context>

<pallas_src>
import functools
import math

import jax
import jax.numpy as jnp
import numpy as np
from jax.experimental import pallas as pl
from jax.experimental.pallas import tpu as pltpu

# ---- deterministic prior / noise scalars (p.prior_param, p.sig_y) ----
SIG_Y = 0.1        # observation noise std used by p.loglik
MU_THETA = 0.0     # p.prior_param['mu_theta']
SIG_THETA = 1.0    # p.prior_param['sig_theta']
SIG_XI = 0.1       # p.prior_param['sigXi']
LOG2PI = math.log(2.0 * math.pi)


# -----------------------------------------------------------------------------
# Fused kernel: encoder + dynamics stub + decoder + L1 + L2 + L3 + s
# -----------------------------------------------------------------------------
def _fused_elbo_kernel(y_ref, eps_ref, w_enc_ref, b_enc_ref,
                       w_dyn_ref, b_dyn_ref, w_dec_ref, b_dec_ref,
                       mu0_ref, sig0_ref, mu_g_ref, lsg_ref, mu_f_ref, lsf_ref,
                       xs_ref, part_ref, *, block_size, scaler, latent_k, num_b):
    SB, M, ND = y_ref.shape
    K = latent_k

    # ---- amortized encoder: one (SB*M, ND) @ (ND, 2K) matmul for [gamma | z] ----
    y2 = y_ref[...].reshape(SB * M, ND)
    gz = jnp.dot(y2, w_enc_ref[...], preferred_element_type=jnp.float32) + b_enc_ref[...]
    gamma2 = gz[:, :K]
    z2 = gz[:, K:]
    # numerically-stable softplus (positive std)
    tau2 = jnp.maximum(z2, 0.0) + jnp.log(1.0 + jnp.exp(-jnp.abs(z2))) + 1e-4

    # TODO(synk): q.sample_s integrates the latent ODE over each shooting block;
    # stubbed here with a deterministic one-step learned transition (matmul+tanh).
    x2 = jnp.tanh(jnp.dot(gamma2, w_dyn_ref[...], preferred_element_type=jnp.float32)
                  + b_dyn_ref[...])

    # ---- decoder g(x) + L1 = sum of diagonal-Gaussian loglik (constant folded) ----
    y_hat2 = jnp.dot(x2, w_dec_ref[...], preferred_element_type=jnp.float32) + b_dec_ref[...]
    diff = y2 - y_hat2
    l1_const = -0.5 * (LOG2PI + 2.0 * math.log(SIG_Y)) * (SB * M * ND)
    L1p = (-0.5 / (SIG_Y * SIG_Y)) * jnp.sum(diff * diff) + l1_const

    # ---- shooting variables s = gamma + tau * eps, packed with x into one slab ----
    gamma3 = gamma2.reshape(SB, M, K)
    tau3 = tau2.reshape(SB, M, K)
    x3 = x2.reshape(SB, M, K)
    s3 = gamma3 + tau3 * eps_ref[...]
    xs_ref[...] = jnp.concatenate([x3, s3], axis=-1)

    # ---- L2: multiple-shooting KL terms, single masked pass (no sublane slicing) ----
    mu0 = mu0_ref[...].reshape(1, 1, K)
    sig0 = sig0_ref[...].reshape(1, 1, K)
    inv_sig0 = 1.0 / sig0                         # K divides, once per block
    log_sig0 = jnp.log(sig0)

    m_idx = jax.lax.broadcasted_iota(jnp.int32, (SB, M, K), 1)
    is_first = m_idx == 0                         # shooting block 0 -> prior (mu0, sig0)
    is_bnd = (m_idx % block_size) == 0            # any shooting-block boundary

    mu1 = jnp.where(is_first, mu0, x3)
    inv_sig1 = jnp.where(is_first, inv_sig0, 1.0 / SIG_XI)
    log_sig1 = jnp.where(is_first, log_sig0, math.log(SIG_XI))

    e = ((tau3 * inv_sig1) ** 2
         + ((mu1 - gamma3) * inv_sig1) ** 2
         + 2.0 * (log_sig1 - jnp.log(tau3)))
    w3 = jnp.where(is_first, 1.0, jnp.where(is_bnd, scaler, 0.0))
    l2_const = -0.5 * K * (1.0 + scaler * (num_b - 1)) * SB
    L2p = 0.5 * jnp.sum(w3 * e) + l2_const

    # ---- L3: KL over the amortized theta posteriors (counted once, block 0) ----
    def kl_theta(mu, log_sig):
        n = mu.shape[-1]
        a = jnp.sum(jnp.exp(2.0 * log_sig)) / (SIG_THETA * SIG_THETA)
        b = jnp.sum((MU_THETA - mu) ** 2) / (SIG_THETA * SIG_THETA)
        c = 2.0 * (n * math.log(SIG_THETA) - jnp.sum(log_sig))
        return 0.5 * (a + b + c - n)

    l3_val = kl_theta(mu_g_ref[...], lsg_ref[...]) + kl_theta(mu_f_ref[...], lsf_ref[...])
    L3p = jnp.where(pl.program_id(0) == 0, l3_val, 0.0)

    # ---- per-block partials in lanes 0/1/2 of row 0 of an (8,128) tile ----
    row = jax.lax.broadcasted_iota(jnp.int32, (8, 128), 0)
    lane = jax.lax.broadcasted_iota(jnp.int32, (8, 128), 1)
    part_ref[...] = (jnp.where((row == 0) & (lane == 0), L1p, 0.0)
                     + jnp.where((row == 0) & (lane == 1), L2p, 0.0)
                     + jnp.where((row == 0) & (lane == 2), L3p, 0.0))


def _choose_s_block(S, M, ND, K, vmem_budget_bytes=4 << 20):
    """Largest divisor of S whose double-buffered blocked streams fit the budget.

    Conservative budget so the same choice is safe on v7x (64 MiB VMEM) as well
    as v5e/v6e (128 MiB).
    """
    per_traj_bytes = (M * ND + M * K + M * 2 * K) * 4 * 2   # y, eps, x|s, double-buffered
    s_blk = max(1, min(S, vmem_budget_bytes // max(per_traj_bytes, 1)))
    while S % s_blk:
        s_blk -= 1
    return s_blk


# -----------------------------------------------------------------------------
# Wrapper: AmortizedMultipleShootingELBO.forward
# -----------------------------------------------------------------------------
def amortized_ms_elbo_forward(params, t, y, batch_ids, block_size, scaler, rng):
    # TODO(synk): q.rec_net.update_time_grids(t) is a stateful time-grid update
    # with no effect on this synthetic amortized encoder; t / batch_ids unused.
    del t, batch_ids

    S, M, N, D = y.shape
    ND = N * D
    K = params["w_dyn"].shape[0]
    n_g = params["mu_theta_g"].shape[-1]
    n_f = params["mu_theta_F"].shape[-1]
    y_flat = y.reshape(S, M, ND).astype(jnp.float32)

    num_b = len(range(0, M, block_size))
    assert num_b == len(range(0, M - 1, block_size)), (M, block_size)

    # TODO(synk): eps stays a host input (instead of pltpu.prng_*) so the random
    # stream matches the pure-JAX reference exactly.
    eps_full = jax.random.normal(rng, (S, M, K), jnp.float32)

    # fuse the gamma / tau encoder weights into a single matmul operand
    w_enc = jnp.concatenate([params["w_gamma"], params["w_tau"]], axis=1)   # (ND, 2K)
    b_enc = jnp.concatenate([params["b_gamma"], params["b_tau"]], axis=1)   # (1, 2K)

    s_blk = _choose_s_block(S, M, ND, K)
    num_blocks = S // s_blk

    def full(shape):
        return pl.BlockSpec(shape, lambda b: (0,) * len(shape))

    kernel = functools.partial(_fused_elbo_kernel, block_size=int(block_size),
                               scaler=float(scaler), latent_k=K, num_b=num_b)

    xs, partials = pl.pallas_call(
        kernel,
        out_shape=(
            jax.ShapeDtypeStruct((S, M, 2 * K), jnp.float32),          # x | s (packed)
            jax.ShapeDtypeStruct((num_blocks * 8, 128), jnp.float32),  # per-block L1/L2/L3
        ),
        grid_spec=pltpu.PrefetchScalarGridSpec(
            num_scalar_prefetch=0,
            grid=(num_blocks,),
            in_specs=[
                pl.BlockSpec((s_blk, M, ND), lambda b: (b, 0, 0)),   # y
                pl.BlockSpec((s_blk, M, K), lambda b: (b, 0, 0)),    # eps
                full((ND, 2 * K)), full((1, 2 * K)),                 # W_enc, b_enc
                full((K, K)), full((1, K)),                          # W_dyn, b_dyn
                full((K, ND)), full((1, ND)),                        # W_dec, b_dec
                full((1, K)), full((1, K)),                          # mu0, sig0
                full((1, n_g)), full((1, n_g)),                      # mu_theta_g, log_sig_theta_g
                full((1, n_f)), full((1, n_f)),                      # mu_theta_F, log_sig_theta_F
            ],
            out_specs=(
                pl.BlockSpec((s_blk, M, 2 * K), lambda b: (b, 0, 0)),
                pl.BlockSpec((8, 128), lambda b: (b, 0)),
            ),
        ),
        compiler_params=pltpu.CompilerParams(dimension_semantics=("parallel",)),
    )(y_flat, eps_full, w_enc, b_enc,
      params["w_dyn"], params["b_dyn"], params["w_dec"], params["b_dec"],
      params["mu0"].reshape(1, K), params["sig0"].reshape(1, K),
      params["mu_theta_g"], params["log_sig_theta_g"],
      params["mu_theta_F"], params["log_sig_theta_F"])

    totals = jnp.sum(partials, axis=0)     # zero rows / lanes vanish in the sum
    L1, L2, L3 = totals[0], totals[1], totals[2]
    x = xs[..., :K]
    s = xs[:, ::block_size, K:]
    return L1, L2, L3, x, s


# -----------------------------------------------------------------------------
# Pure-JAX reference (same synthetic model) for correctness checking
# -----------------------------------------------------------------------------
def _kl_norm_norm(mu0, mu1, sig0, sig1):
    a = jnp.sum((sig0 / sig1) ** 2, -1, keepdims=True)
    b = jnp.sum((mu1 - mu0) ** 2 / sig1 ** 2, -1, keepdims=True)
    c = 2.0 * jnp.sum(jnp.log(sig1) - jnp.log(sig0), -1, keepdims=True)
    return 0.5 * (a + b + c - mu0.shape[-1])


def reference_forward(params, t, y, batch_ids, block_size, scaler, rng):
    del t, batch_ids
    S, M, N, D = y.shape
    ND = N * D
    K = params["w_dyn"].shape[0]
    y_flat = y.reshape(S, M, ND).astype(jnp.float32)

    gamma = y_flat @ params["w_gamma"] + params["b_gamma"]
    z = y_flat @ params["w_tau"] + params["b_tau"]
    tau = jnp.maximum(z, 0.0) + jnp.log(1.0 + jnp.exp(-jnp.abs(z))) + 1e-4
    x = jnp.tanh(gamma @ params["w_dyn"] + params["b_dyn"])
    y_hat = x @ params["w_dec"] + params["b_dec"]
    ll = (-0.5 * (y_flat - y_hat) ** 2 / SIG_Y ** 2
          - 0.5 * (LOG2PI + 2.0 * math.log(SIG_Y)))
    L1 = jnp.sum(ll)

    gsub = gamma[:, ::block_size]
    tsub = tau[:, ::block_size]
    xsub = x[:, 0:M - 1:block_size]
    B = xsub.shape[1]
    eps_full = jax.random.normal(rng, (S, M, K), jnp.float32)
    eps = eps_full[:, ::block_size]
    s = gsub + tsub * eps

    mu0 = jnp.broadcast_to(params["mu0"][0], (S, K))
    sig0 = jnp.broadcast_to(params["sig0"][0], (S, K))
    L2_0 = _kl_norm_norm(gsub[:, 0], mu0, tsub[:, 0], sig0).sum()
    sigXi = jnp.full((S, B - 1, K), SIG_XI, jnp.float32)
    L2_1 = _kl_norm_norm(gsub[:, 1:], xsub[:, 1:], tsub[:, 1:], sigXi).sum()
    L2 = L2_0 + scaler * L2_1

    def kl_theta(mu, log_sig):
        n = mu.size
        mu = mu.reshape(1, n)
        sig = jnp.exp(log_sig).reshape(1, n)
        return _kl_norm_norm(mu, jnp.full((1, n), MU_THETA), sig,
                             jnp.full((1, n), SIG_THETA)).sum()

    L3 = (kl_theta(params["mu_theta_g"], params["log_sig_theta_g"])
          + kl_theta(params["mu_theta_F"], params["log_sig_theta_F"]))
    return L1, L2, L3, x, s


# -----------------------------------------------------------------------------
if __name__ == "__main__":
    key = jax.random.PRNGKey(0)
    S, M, N, D, K = 2, 8, 4, 4, 32
    ND = N * D
    N_G, N_F = 64, 128
    block_size = 2
    scaler = 0.7

    keys = jax.random.split(key, 16)
    params = {
        "w_gamma": 0.3 * jax.random.normal(keys[0], (ND, K), jnp.float32),
        "b_gamma": 0.1 * jax.random.normal(keys[1], (1, K), jnp.float32),
        "w_tau": 0.3 * jax.random.normal(keys[2], (ND, K), jnp.float32),
        "b_tau": 0.1 * jax.random.normal(keys[3], (1, K), jnp.float32),
        "w_dyn": (0.3 / math.sqrt(K)) * jax.random.normal(keys[4], (K, K), jnp.float32),
        "b_dyn": 0.1 * jax.random.normal(keys[5], (1, K), jnp.float32),
        "w_dec": (0.5 / math.sqrt(K)) * jax.random.normal(keys[6], (K, ND), jnp.float32),
        "b_dec": 0.1 * jax.random.normal(keys[7], (1, ND), jnp.float32),
        "mu0": 0.1 * jax.random.normal(keys[8], (1, 1, K), jnp.float32),
        "sig0": jnp.exp(0.1 * jax.random.normal(keys[9], (1, 1, K), jnp.float32)),
        "mu_theta_g": 0.1 * jax.random.normal(keys[10], (1, N_G), jnp.float32),
        "log_sig_theta_g": -1.0 + 0.1 * jax.random.normal(keys[11], (1, N_G), jnp.float32),
        "mu_theta_F": 0.1 * jax.random.normal(keys[12], (1, N_F), jnp.float32),
        "log_sig_theta_F": -1.0 + 0.1 * jax.random.normal(keys[13], (1, N_F), jnp.float32),
    }

    t = jnp.cumsum(jnp.full((S, M, 1), 0.1, jnp.float32), axis=1)   # (S, M, 1)
    y = jax.random.normal(keys[14], (S, M, N, D), jnp.float32)      # (S, M, N, D)
    batch_ids = jnp.arange(S, dtype=jnp.int32)                      # (S,)
    rng = keys[15]

    outs = amortized_ms_elbo_forward(params, t, y, batch_ids, block_size, scaler, rng)
    outs = jax.block_until_ready(outs)

    refs = reference_forward(params, t, y, batch_ids, block_size, scaler, rng)
    for o, r in zip(outs, refs):
        np.testing.assert_allclose(np.asarray(o), np.asarray(r), rtol=1e-4, atol=1e-4)

    print("KERNEL_OK")
</pallas_src>

<mosaic_0001>
module attributes {stable_mosaic.version = 11 : i64} {
  func.func @_fused_elbo_kernel(%arg0: i32, %arg1: memref<2x8x16xf32, #tpu.memory_space<vmem>>, %arg2: memref<2x8x32xf32, #tpu.memory_space<vmem>>, %arg3: memref<16x64xf32, #tpu.memory_space<vmem>>, %arg4: memref<1x64xf32, #tpu.memory_space<vmem>>, %arg5: memref<32x32xf32, #tpu.memory_space<vmem>>, %arg6: memref<1x32xf32, #tpu.memory_space<vmem>>, %arg7: memref<32x16xf32, #tpu.memory_space<vmem>>, %arg8: memref<1x16xf32, #tpu.memory_space<vmem>>, %arg9: memref<1x32xf32, #tpu.memory_space<vmem>>, %arg10: memref<1x32xf32, #tpu.memory_space<vmem>>, %arg11: memref<1x64xf32, #tpu.memory_space<vmem>>, %arg12: memref<1x64xf32, #tpu.memory_space<vmem>>, %arg13: memref<1x128xf32, #tpu.memory_space<vmem>>, %arg14: memref<1x128xf32, #tpu.memory_space<vmem>>, %arg15: memref<2x8x64xf32, #tpu.memory_space<vmem>>, %arg16: memref<8x128xf32, #tpu.memory_space<vmem>>) attributes {dimension_semantics = [#tpu.dimension_semantics<parallel>], iteration_bounds = array<i64: 1>, scalar_prefetch = 0 : i64, scratch_operands = 0 : i64, tpu.core_type = #tpu.core_type<tc>, window_params = [{transform_indices = @transform_0, window_bounds = array<i64: 2, 8, 16>}, {transform_indices = @transform_1, window_bounds = array<i64: 2, 8, 32>}, {pipeline_mode = #tpu.pipeline_mode<synchronous>, transform_indices = @transform_2, window_bounds = array<i64: 16, 64>}, {pipeline_mode = #tpu.pipeline_mode<synchronous>, transform_indices = @transform_3, window_bounds = array<i64: 1, 64>}, {pipeline_mode = #tpu.pipeline_mode<synchronous>, transform_indices = @transform_4, window_bounds = array<i64: 32, 32>}, {pipeline_mode = #tpu.pipeline_mode<synchronous>, transform_indices = @transform_5, window_bounds = array<i64: 1, 32>}, {pipeline_mode = #tpu.pipeline_mode<synchronous>, transform_indices = @transform_6, window_bounds = array<i64: 32, 16>}, {pipeline_mode = #tpu.pipeline_mode<synchronous>, transform_indices = @transform_7, window_bounds = array<i64: 1, 16>}, {pipeline_mode = #tpu.pipeline_mode<synchronous>, transform_indices = @transform_8, window_bounds = array<i64: 1, 32>}, {pipeline_mode = #tpu.pipeline_mode<synchronous>, transform_indices = @transform_9, window_bounds = array<i64: 1, 32>}, {pipeline_mode = #tpu.pipeline_mode<synchronous>, transform_indices = @transform_10, window_bounds = array<i64: 1, 64>}, {pipeline_mode = #tpu.pipeline_mode<synchronous>, transform_indices = @transform_11, window_bounds = array<i64: 1, 64>}, {pipeline_mode = #tpu.pipeline_mode<synchronous>, transform_indices = @transform_12, window_bounds = array<i64: 1, 128>}, {pipeline_mode = #tpu.pipeline_mode<synchronous>, transform_indices = @transform_13, window_bounds = array<i64: 1, 128>}, {transform_indices = @transform_14, window_bounds = array<i64: 2, 8, 64>}, {transform_indices = @transform_15, window_bounds = array<i64: 8, 128>}]} {
    %c0 = arith.constant 0 : index
    %c0_0 = arith.constant 0 : index
    %c0_1 = arith.constant 0 : index
    %0 = vector.load %arg1[%c0, %c0_0, %c0_1] : memref<2x8x16xf32, #tpu.memory_space<vmem>>, vector<2x8x16xf32>
    %1 = vector.shape_cast %0 : vector<2x8x16xf32> to vector<16x16xf32>
    %c0_2 = arith.constant 0 : index
    %c0_3 = arith.constant 0 : index
    %2 = vector.load %arg3[%c0_2, %c0_3] : memref<16x64xf32, #tpu.memory_space<vmem>>, vector<16x64xf32>
    %cst = arith.constant dense<0.000000e+00> : vector<16x64xf32>
    %3 = tpu.matmul %1, %2, %cst {dimension_numbers = #tpu.dot_dimension_numbers<[1], [0], [0], [1], [0, 0, 1, 1], [], []>} : vector<16x16xf32>, vector<16x64xf32>, vector<16x64xf32> -> vector<16x64xf32>
    %c0_4 = arith.constant 0 : index
    %c0_5 = arith.constant 0 : index
    %4 = vector.load %arg4[%c0_4, %c0_5] : memref<1x64xf32, #tpu.memory_space<vmem>>, vector<1x64xf32>
    %5 = vector.broadcast %4 : vector<1x64xf32> to vector<16x64xf32>
    %6 = arith.addf %3, %5 : vector<16x64xf32>
    %7 = vector.extract_strided_slice %6 {offsets = [0, 0], sizes = [16, 32], strides = [1, 1]} : vector<16x64xf32> to vector<16x32xf32>
    %8 = vector.extract_strided_slice %6 {offsets = [0, 32], sizes = [16, 32], strides = [1, 1]} : vector<16x64xf32> to vector<16x32xf32>
    %cst_6 = arith.constant 0.000000e+00 : f32
    %9 = vector.broadcast %cst_6 : f32 to vector<16x32xf32>
    %10 = arith.maximumf %8, %9 : vector<16x32xf32>
    %11 = math.absf %8 : vector<16x32xf32>
    %cst_7 = arith.constant 0.000000e+00 : f32
    %12 = vector.broadcast %cst_7 : f32 to vector<16x32xf32>
    %13 = arith.subf %12, %11 : vector<16x32xf32>
    %14 = math.exp %13 : vector<16x32xf32>
    %cst_8 = arith.constant 1.000000e+00 : f32
    %15 = vector.broadcast %cst_8 : f32 to vector<16x32xf32>
    %16 = arith.addf %15, %14 : vector<16x32xf32>
    %17 = math.log %16 : vector<16x32xf32>
    %18 = arith.addf %10, %17 : vector<16x32xf32>
    %cst_9 = arith.constant 9.99999974E-5 : f32
    %19 = vector.broadcast %cst_9 : f32 to vector<16x32xf32>
    %20 = arith.addf %18, %19 : vector<16x32xf32>
    %c0_10 = arith.constant 0 : index
    %c0_11 = arith.constant 0 : index
    %21 = vector.load %arg5[%c0_10, %c0_11] : memref<32x32xf32, #tpu.memory_space<vmem>>, vector<32x32xf32>
    %cst_12 = arith.constant dense<0.000000e+00> : vector<16x32xf32>
    %22 = tpu.matmul %7, %21, %cst_12 {dimension_numbers = #tpu.dot_dimension_numbers<[1], [0], [0], [1], [0, 0, 1, 1], [], []>} : vector<16x32xf32>, vector<32x32xf32>, vector<16x32xf32> -> vector<16x32xf32>
    %c0_13 = arith.constant 0 : index
    %c0_14 = arith.constant 0 : index
    %23 = vector.load %arg6[%c0_13, %c0_14] : memref<1x32xf32, #tpu.memory_space<vmem>>, vector<1x32xf32>
    %24 = vector.broadcast %23 : vector<1x32xf32> to vector<16x32xf32>
    %25 = arith.addf %22, %24 : vector<16x32xf32>
    %26 = math.tanh %25 : vector<16x32xf32>
    %c0_15 = arith.constant 0 : index
    %c0_16 = arith.constant 0 : index
    %27 = vector.load %arg7[%c0_15, %c0_16] : memref<32x16xf32, #tpu.memory_space<vmem>>, vector<32x16xf32>
    %cst_17 = arith.constant dense<0.000000e+00> : vector<16x16xf32>
    %28 = tpu.matmul %26, %27, %cst_17 {dimension_numbers = #tpu.dot_dimension_numbers<[1], [0], [0], [1], [0, 0, 1, 1], [], []>} : vector<16x32xf32>, vector<32x16xf32>, vector<16x16xf32> -> vector<16x16xf32>
    %c0_18 = arith.constant 0 : index
    %c0_19 = arith.constant 0 : index
    %29 = vector.load %arg8[%c0_18, %c0_19] : memref<1x16xf32, #tpu.memory_space<vmem>>, vector<1x16xf32>
    %30 = vector.broadcast %29 : vector<1x16xf32> to vector<16x16xf32>
    %31 = arith.addf %28, %30 : vector<16x16xf32>
    %32 = arith.subf %1, %31 : vector<16x16xf32>
    %33 = arith.mulf %32, %32 : vector<16x16xf32>
    %34 = vector.shape_cast %33 : vector<16x16xf32> to vector<1x16x16xf32>
    %cst_20 = arith.constant dense<0.000000e+00> : vector<1xf32>
    %35 = vector.multi_reduction <add>, %34, %cst_20 [1, 2] : vector<1x16x16xf32> to vector<1xf32>
    %36 = vector.shape_cast %35 : vector<1xf32> to vector<1x1x1xf32>
    %37 = vector.extract %36[0, 0, 0] : f32 from vector<1x1x1xf32>
    %cst_21 = arith.constant -5.000000e+01 : f32
    %38 = arith.mulf %cst_21, %37 : f32
    %cst_22 = arith.constant 354.213531 : f32
    %39 = arith.addf %38, %cst_22 : f32
    %40 = vector.shape_cast %7 : vector<16x32xf32> to vector<2x8x32xf32>
    %41 = vector.shape_cast %20 : vector<16x32xf32> to vector<2x8x32xf32>
    %42 = vector.shape_cast %26 : vector<16x32xf32> to vector<2x8x32xf32>
    %c0_23 = arith.constant 0 : index
    %c0_24 = arith.constant 0 : index
    %c0_25 = arith.constant 0 : index
    %43 = vector.load %arg2[%c0_23, %c0_24, %c0_25] : memref<2x8x32xf32, #tpu.memory_space<vmem>>, vector<2x8x32xf32>
    %44 = arith.mulf %41, %43 : vector<2x8x32xf32>
    %45 = arith.addf %40, %44 : vector<2x8x32xf32>
    %46 = tpu.concatenate %42, %45 in 2 : vector<2x8x32xf32>, vector<2x8x32xf32> -> vector<2x8x64xf32>
    %c0_26 = arith.constant 0 : index
    %c0_27 = arith.constant 0 : index
    %c0_28 = arith.constant 0 : index
    %47 = vector.load %arg15[%c0_26, %c0_27, %c0_28] : memref<2x8x64xf32, #tpu.memory_space<vmem>>, vector<2x8x64xf32>
    tpu.vector_store %arg15[%c0_26, %c0_27, %c0_28], %46 {strides = array<i32>} : memref<2x8x64xf32, #tpu.memory_space<vmem>>, vector<2x8x64xf32>,
    %c0_29 = arith.constant 0 : index
    %c0_30 = arith.constant 0 : index
    %48 = vector.load %arg9[%c0_29, %c0_30] : memref<1x32xf32, #tpu.memory_space<vmem>>, vector<1x32xf32>
    %49 = vector.shape_cast %48 : vector<1x32xf32> to vector<1x1x32xf32>
    %c0_31 = arith.constant 0 : index
    %c0_32 = arith.constant 0 : index
    %50 = vector.load %arg10[%c0_31, %c0_32] : memref<1x32xf32, #tpu.memory_space<vmem>>, vector<1x32xf32>
    %51 = vector.shape_cast %50 : vector<1x32xf32> to vector<1x1x32xf32>
    %cst_33 = arith.constant 1.000000e+00 : f32
    %52 = vector.broadcast %cst_33 : f32 to vector<1x1x32xf32>
    %53 = arith.divf %52, %51 : vector<1x1x32xf32>
    %54 = math.log %51 : vector<1x1x32xf32>
    %55 = tpu.iota {dimensions = array<i32: 1>} : vector<2x8x32xi32>
    %c0_i32 = arith.constant 0 : i32
    %56 = vector.broadcast %c0_i32 : i32 to vector<2x8x32xi32>
    %57 = arith.cmpi eq, %55, %56 : vector<2x8x32xi32>
    %c2_i32 = arith.constant 2 : i32
    %c0_i32_34 = arith.constant 0 : i32
    %58 = arith.cmpi eq, %c2_i32, %c0_i32_34 : i32
    %c1_i32 = arith.constant 1 : i32
    %59 = arith.select %58, %c1_i32, %c2_i32 : i32
    %60 = vector.broadcast %59 : i32 to vector<2x8x32xi32>
    %61 = arith.remsi %55, %60 : vector<2x8x32xi32>
    %c0_i32_35 = arith.constant 0 : i32
    %62 = vector.broadcast %c0_i32_35 : i32 to vector<2x8x32xi32>
    %63 = arith.cmpi ne, %61, %62 : vector<2x8x32xi32>
    %c0_i32_36 = arith.constant 0 : i32
    %64 = vector.broadcast %c0_i32_36 : i32 to vector<2x8x32xi32>
    %65 = arith.cmpi slt, %61, %64 : vector<2x8x32xi32>
    %c0_i32_37 = arith.constant 0 : i32
    %66 = arith.cmpi slt, %59, %c0_i32_37 : i32
    %67 = vector.broadcast %66 : i1 to vector<2x8x32xi1>
    %68 = vector.broadcast %67 : vector<2x8x32xi1> to vector<2x8x32xi1>
    %69 = arith.xori %65, %68 : vector<2x8x32xi1>
    %70 = arith.andi %69, %63 : vector<2x8x32xi1>
    %71 = vector.broadcast %59 : i32 to vector<2x8x32xi32>
    %72 = arith.addi %61, %71 : vector<2x8x32xi32>
    %73 = arith.select %70, %72, %61 : vector<2x8x32xi1>, vector<2x8x32xi32>
    %c0_i32_38 = arith.constant 0 : i32
    %74 = vector.broadcast %c0_i32_38 : i32 to vector<2x8x32xi32>
    %75 = arith.cmpi eq, %73, %74 : vector<2x8x32xi32>
    %76 = vector.shape_cast %49 : vector<1x1x32xf32> to vector<1x1x32xf32>
    %77 = vector.broadcast %76 : vector<1x1x32xf32> to vector<2x8x32xf32>
    %78 = arith.select %57, %77, %42 : vector<2x8x32xi1>, vector<2x8x32xf32>
    %cst_39 = arith.constant 1.000000e+01 : f32
    %79 = vector.shape_cast %53 : vector<1x1x32xf32> to vector<1x1x32xf32>
    %80 = vector.broadcast %79 : vector<1x1x32xf32> to vector<2x8x32xf32>
    %81 = vector.broadcast %cst_39 : f32 to vector<2x8x32xf32>
    %82 = arith.select %57, %80, %81 : vector<2x8x32xi1>, vector<2x8x32xf32>
    %cst_40 = arith.constant -2.30258512 : f32
    %83 = vector.shape_cast %54 : vector<1x1x32xf32> to vector<1x1x32xf32>
    %84 = vector.broadcast %83 : vector<1x1x32xf32> to vector<2x8x32xf32>
    %85 = vector.broadcast %cst_40 : f32 to vector<2x8x32xf32>
    %86 = arith.select %57, %84, %85 : vector<2x8x32xi1>, vector<2x8x32xf32>
    %87 = arith.mulf %41, %82 : vector<2x8x32xf32>
    %88 = arith.mulf %87, %87 : vector<2x8x32xf32>
    %89 = arith.subf %78, %40 : vector<2x8x32xf32>
    %90 = arith.mulf %89, %82 : vector<2x8x32xf32>
    %91 = arith.mulf %90, %90 : vector<2x8x32xf32>
    %92 = arith.addf %88, %91 : vector<2x8x32xf32>
    %93 = math.log %41 : vector<2x8x32xf32>
    %94 = arith.subf %86, %93 : vector<2x8x32xf32>
    %cst_41 = arith.constant 2.000000e+00 : f32
    %95 = vector.broadcast %cst_41 : f32 to vector<2x8x32xf32>
    %96 = arith.mulf %95, %94 : vector<2x8x32xf32>
    %97 = arith.addf %92, %96 : vector<2x8x32xf32>
    %cst_42 = arith.constant 0.699999988 : f32
    %cst_43 = arith.constant 0.000000e+00 : f32
    %98 = vector.broadcast %cst_42 : f32 to vector<2x8x32xf32>
    %99 = vector.broadcast %cst_43 : f32 to vector<2x8x32xf32>
    %100 = arith.select %75, %98, %99 : vector<2x8x32xi1>, vector<2x8x32xf32>
    %cst_44 = arith.constant 1.000000e+00 : f32
    %101 = vector.broadcast %cst_44 : f32 to vector<2x8x32xf32>
    %102 = arith.select %57, %101, %100 : vector<2x8x32xi1>, vector<2x8x32xf32>
    %103 = arith.mulf %102, %97 : vector<2x8x32xf32>
    %104 = vector.shape_cast %103 : vector<2x8x32xf32> to vector<1x2x8x32xf32>
    %cst_45 = arith.constant dense<0.000000e+00> : vector<1xf32>
    %105 = vector.multi_reduction <add>, %104, %cst_45 [1, 2, 3] : vector<1x2x8x32xf32> to vector<1xf32>
    %106 = vector.shape_cast %105 : vector<1xf32> to vector<1x1x1x1xf32>
    %107 = vector.extract %106[0, 0, 0, 0] : f32 from vector<1x1x1x1xf32>
    %cst_46 = arith.constant 5.000000e-01 : f32
    %108 = arith.mulf %cst_46, %107 : f32
    %cst_47 = arith.constant -99.1999969 : f32
    %109 = arith.addf %108, %cst_47 : f32
    %c0_48 = arith.constant 0 : index
    %c0_49 = arith.constant 0 : index
    %110 = vector.load %arg11[%c0_48, %c0_49] : memref<1x64xf32, #tpu.memory_space<vmem>>, vector<1x64xf32>
    %c0_50 = arith.constant 0 : index
    %c0_51 = arith.constant 0 : index
    %111 = vector.load %arg12[%c0_50, %c0_51] : memref<1x64xf32, #tpu.memory_space<vmem>>, vector<1x64xf32>
    %cst_52 = arith.constant 2.000000e+00 : f32
    %112 = vector.broadcast %cst_52 : f32 to vector<1x64xf32>
    %113 = arith.mulf %112, %111 : vector<1x64xf32>
    %114 = math.exp %113 : vector<1x64xf32>
    %115 = vector.shape_cast %114 : vector<1x64xf32> to vector<1x1x64xf32>
    %cst_53 = arith.constant dense<0.000000e+00> : vector<1xf32>
    %116 = vector.multi_reduction <add>, %115, %cst_53 [1, 2] : vector<1x1x64xf32> to vector<1xf32>
    %117 = vector.shape_cast %116 : vector<1xf32> to vector<1x1x1xf32>
    %118 = vector.extract %117[0, 0, 0] : f32 from vector<1x1x1xf32>
    %cst_54 = arith.constant 1.000000e+00 : f32
    %119 = arith.divf %118, %cst_54 : f32
    %cst_55 = arith.constant 0.000000e+00 : f32
    %120 = vector.broadcast %cst_55 : f32 to vector<1x64xf32>
    %121 = arith.subf %120, %110 : vector<1x64xf32>
    %122 = arith.mulf %121, %121 : vector<1x64xf32>
    %123 = vector.shape_cast %122 : vector<1x64xf32> to vector<1x1x64xf32>
    %cst_56 = arith.constant dense<0.000000e+00> : vector<1xf32>
    %124 = vector.multi_reduction <add>, %123, %cst_56 [1, 2] : vector<1x1x64xf32> to vector<1xf32>
    %125 = vector.shape_cast %124 : vector<1xf32> to vector<1x1x1xf32>
    %126 = vector.extract %125[0, 0, 0] : f32 from vector<1x1x1xf32>
    %cst_57 = arith.constant 1.000000e+00 : f32
    %127 = arith.divf %126, %cst_57 : f32
    %128 = vector.shape_cast %111 : vector<1x64xf32> to vector<1x1x64xf32>
    %cst_58 = arith.constant dense<0.000000e+00> : vector<1xf32>
    %129 = vector.multi_reduction <add>, %128, %cst_58 [1, 2] : vector<1x1x64xf32> to vector<1xf32>
    %130 = vector.shape_cast %129 : vector<1xf32> to vector<1x1x1xf32>
    %131 = vector.extract %130[0, 0, 0] : f32 from vector<1x1x1xf32>
    %cst_59 = arith.constant 0.000000e+00 : f32
    %132 = arith.subf %cst_59, %131 : f32
    %cst_60 = arith.constant 2.000000e+00 : f32
    %133 = arith.mulf %cst_60, %132 : f32
    %134 = arith.addf %119, %127 : f32
    %135 = arith.addf %134, %133 : f32
    %cst_61 = arith.constant 6.400000e+01 : f32
    %136 = arith.subf %135, %cst_61 : f32
    %cst_62 = arith.constant 5.000000e-01 : f32
    %137 = arith.mulf %cst_62, %136 : f32
    %c0_63 = arith.constant 0 : index
    %c0_64 = arith.constant 0 : index
    %138 = vector.load %arg13[%c0_63, %c0_64] : memref<1x128xf32, #tpu.memory_space<vmem>>, vector<1x128xf32>
    %c0_65 = arith.constant 0 : index
    %c0_66 = arith.constant 0 : index
    %139 = vector.load %arg14[%c0_65, %c0_66] : memref<1x128xf32, #tpu.memory_space<vmem>>, vector<1x128xf32>
    %cst_67 = arith.constant 2.000000e+00 : f32
    %140 = vector.broadcast %cst_67 : f32 to vector<1x128xf32>
    %141 = arith.mulf %140, %139 : vector<1x128xf32>
    %142 = math.exp %141 : vector<1x128xf32>
    %143 = vector.shape_cast %142 : vector<1x128xf32> to vector<1x1x128xf32>
    %cst_68 = arith.constant dense<0.000000e+00> : vector<1xf32>
    %144 = vector.multi_reduction <add>, %143, %cst_68 [1, 2] : vector<1x1x128xf32> to vector<1xf32>
    %145 = vector.shape_cast %144 : vector<1xf32> to vector<1x1x1xf32>
    %146 = vector.extract %145[0, 0, 0] : f32 from vector<1x1x1xf32>
    %cst_69 = arith.constant 1.000000e+00 : f32
    %147 = arith.divf %146, %cst_69 : f32
    %cst_70 = arith.constant 0.000000e+00 : f32
    %148 = vector.broadcast %cst_70 : f32 to vector<1x128xf32>
    %149 = arith.subf %148, %138 : vector<1x128xf32>
    %150 = arith.mulf %149, %149 : vector<1x128xf32>
    %151 = vector.shape_cast %150 : vector<1x128xf32> to vector<1x1x128xf32>
    %cst_71 = arith.constant dense<0.000000e+00> : vector<1xf32>
    %152 = vector.multi_reduction <add>, %151, %cst_71 [1, 2] : vector<1x1x128xf32> to vector<1xf32>
    %153 = vector.shape_cast %152 : vector<1xf32> to vector<1x1x1xf32>
    %154 = vector.extract %153[0, 0, 0] : f32 from vector<1x1x1xf32>
    %cst_72 = arith.constant 1.000000e+00 : f32
    %155 = arith.divf %154, %cst_72 : f32
    %156 = vector.shape_cast %139 : vector<1x128xf32> to vector<1x1x128xf32>
    %cst_73 = arith.constant dense<0.000000e+00> : vector<1xf32>
    %157 = vector.multi_reduction <add>, %156, %cst_73 [1, 2] : vector<1x1x128xf32> to vector<1xf32>
    %158 = vector.shape_cast %157 : vector<1xf32> to vector<1x1x1xf32>
    %159 = vector.extract %158[0, 0, 0] : f32 from vector<1x1x1xf32>
    %cst_74 = arith.constant 0.000000e+00 : f32
    %160 = arith.subf %cst_74, %159 : f32
    %cst_75 = arith.constant 2.000000e+00 : f32
    %161 = arith.mulf %cst_75, %160 : f32
    %162 = arith.addf %147, %155 : f32
    %163 = arith.addf %162, %161 : f32
    %cst_76 = arith.constant 1.280000e+02 : f32
    %164 = arith.subf %163, %cst_76 : f32
    %cst_77 = arith.constant 5.000000e-01 : f32
    %165 = arith.mulf %cst_77, %164 : f32
    %166 = arith.addf %137, %165 : f32
    %c0_i32_78 = arith.constant 0 : i32
    %167 = arith.cmpi eq, %arg0, %c0_i32_78 : i32
    %cst_79 = arith.constant 0.000000e+00 : f32
    %168 = arith.select %167, %166, %cst_79 : f32
    %169 = tpu.iota {dimensions = array<i32: 0>} : vector<8x128xi32>
    %170 = tpu.iota {dimensions = array<i32: 1>} : vector<8x128xi32>
    %c0_i32_80 = arith.constant 0 : i32
    %171 = vector.broadcast %c0_i32_80 : i32 to vector<8x128xi32>
    %172 = arith.cmpi eq, %169, %171 : vector<8x128xi32>
    %c0_i32_81 = arith.constant 0 : i32
    %173 = vector.broadcast %c0_i32_81 : i32 to vector<8x128xi32>
    %174 = arith.cmpi eq, %170, %173 : vector<8x128xi32>
    %175 = arith.andi %172, %174 : vector<8x128xi1>
    %cst_82 = arith.constant 0.000000e+00 : f32
    %176 = vector.broadcast %39 : f32 to vector<8x128xf32>
    %177 = vector.broadcast %cst_82 : f32 to vector<8x128xf32>
    %178 = arith.select %175, %176, %177 : vector<8x128xi1>, vector<8x128xf32>
    %c0_i32_83 = arith.constant 0 : i32
    %179 = vector.broadcast %c0_i32_83 : i32 to vector<8x128xi32>
    %180 = arith.cmpi eq, %169, %179 : vector<8x128xi32>
    %c1_i32_84 = arith.constant 1 : i32
    %181 = vector.broadcast %c1_i32_84 : i32 to vector<8x128xi32>
    %182 = arith.cmpi eq, %170, %181 : vector<8x128xi32>
    %183 = arith.andi %180, %182 : vector<8x128xi1>
    %cst_85 = arith.constant 0.000000e+00 : f32
    %184 = vector.broadcast %109 : f32 to vector<8x128xf32>
    %185 = vector.broadcast %cst_85 : f32 to vector<8x128xf32>
    %186 = arith.select %183, %184, %185 : vector<8x128xi1>, vector<8x128xf32>
    %187 = arith.addf %178, %186 : vector<8x128xf32>
    %c0_i32_86 = arith.constant 0 : i32
    %188 = vector.broadcast %c0_i32_86 : i32 to vector<8x128xi32>
    %189 = arith.cmpi eq, %169, %188 : vector<8x128xi32>
    %c2_i32_87 = arith.constant 2 : i32
    %190 = vector.broadcast %c2_i32_87 : i32 to vector<8x128xi32>
    %191 = arith.cmpi eq, %170, %190 : vector<8x128xi32>
    %192 = arith.andi %189, %191 : vector<8x128xi1>
    %cst_88 = arith.constant 0.000000e+00 : f32
    %193 = vector.broadcast %168 : f32 to vector<8x128xf32>
    %194 = vector.broadcast %cst_88 : f32 to vector<8x128xf32>
    %195 = arith.select %192, %193, %194 : vector<8x128xi1>, vector<8x128xf32>
    %196 = arith.addf %187, %195 : vector<8x128xf32>
    %c0_89 = arith.constant 0 : index
    %c0_90 = arith.constant 0 : index
    %197 = vector.load %arg16[%c0_89, %c0_90] : memref<8x128xf32, #tpu.memory_space<vmem>>, vector<8x128xf32>
    tpu.vector_store %arg16[%c0_89, %c0_90], %196 {strides = array<i32>} : memref<8x128xf32, #tpu.memory_space<vmem>>, vector<8x128xf32>,
    return
  }
  func.func @transform_0(%arg0: i32) -> (i32, i32, i32) {
    %c0_i32 = arith.constant 0 : i32
    %c0_i32_0 = arith.constant 0 : i32
    %c0_i32_1 = arith.constant 0 : i32
    return %arg0, %c0_i32, %c0_i32_0 : i32, i32, i32
  }
  func.func @transform_1(%arg0: i32) -> (i32, i32, i32) {
    %c0_i32 = arith.constant 0 : i32
    %c0_i32_0 = arith.constant 0 : i32
    %c0_i32_1 = arith.constant 0 : i32
    return %arg0, %c0_i32, %c0_i32_0 : i32, i32, i32
  }
  func.func @transform_2(%arg0: i32) -> (i32, i32) {
    %c0_i32 = arith.constant 0 : i32
    %c0_i32_0 = arith.constant 0 : i32
    %c0_i32_1 = arith.constant 0 : i32
    return %c0_i32, %c0_i32_0 : i32, i32
  }
  func.func @transform_3(%arg0: i32) -> (i32, i32) {
    %c0_i32 = arith.constant 0 : i32
    %c0_i32_0 = arith.constant 0 : i32
    %c0_i32_1 = arith.constant 0 : i32
    return %c0_i32, %c0_i32_0 : i32, i32
  }
  func.func @transform_4(%arg0: i32) -> (i32, i32) {
    %c0_i32 = arith.constant 0 : i32
    %c0_i32_0 = arith.constant 0 : i32
    %c0_i32_1 = arith.constant 0 : i32
    return %c0_i32, %c0_i32_0 : i32, i32
  }
  func.func @transform_5(%arg0: i32) -> (i32, i32) {
    %c0_i32 = arith.constant 0 : i32
    %c0_i32_0 = arith.constant 0 : i32
    %c0_i32_1 = arith.constant 0 : i32
    return %c0_i32, %c0_i32_0 : i32, i32
  }
  func.func @transform_6(%arg0: i32) -> (i32, i32) {
    %c0_i32 = arith.constant 0 : i32
    %c0_i32_0 = arith.constant 0 : i32
    %c0_i32_1 = arith.constant 0 : i32
    return %c0_i32, %c0_i32_0 : i32, i32
  }
  func.func @transform_7(%arg0: i32) -> (i32, i32) {
    %c0_i32 = arith.constant 0 : i32
    %c0_i32_0 = arith.constant 0 : i32
    %c0_i32_1 = arith.constant 0 : i32
    return %c0_i32, %c0_i32_0 : i32, i32
  }
  func.func @transform_8(%arg0: i32) -> (i32, i32) {
    %c0_i32 = arith.constant 0 : i32
    %c0_i32_0 = arith.constant 0 : i32
    %c0_i32_1 = arith.constant 0 : i32
    return %c0_i32, %c0_i32_0 : i32, i32
  }
  func.func @transform_9(%arg0: i32) -> (i32, i32) {
    %c0_i32 = arith.constant 0 : i32
    %c0_i32_0 = arith.constant 0 : i32
    %c0_i32_1 = arith.constant 0 : i32
    return %c0_i32, %c0_i32_0 : i32, i32
  }
  func.func @transform_10(%arg0: i32) -> (i32, i32) {
    %c0_i32 = arith.constant 0 : i32
    %c0_i32_0 = arith.constant 0 : i32
    %c0_i32_1 = arith.constant 0 : i32
    return %c0_i32, %c0_i32_0 : i32, i32
  }
  func.func @transform_11(%arg0: i32) -> (i32, i32) {
    %c0_i32 = arith.constant 0 : i32
    %c0_i32_0 = arith.constant 0 : i32
    %c0_i32_1 = arith.constant 0 : i32
    return %c0_i32, %c0_i32_0 : i32, i32
  }
  func.func @transform_12(%arg0: i32) -> (i32, i32) {
    %c0_i32 = arith.constant 0 : i32
    %c0_i32_0 = arith.constant 0 : i32
    %c0_i32_1 = arith.constant 0 : i32
    return %c0_i32, %c0_i32_0 : i32, i32
  }
  func.func @transform_13(%arg0: i32) -> (i32, i32) {
    %c0_i32 = arith.constant 0 : i32
    %c0_i32_0 = arith.constant 0 : i32
    %c0_i32_1 = arith.constant 0 : i32
    return %c0_i32, %c0_i32_0 : i32, i32
  }
  func.func @transform_14(%arg0: i32) -> (i32, i32, i32) {
    %c0_i32 = arith.constant 0 : i32
    %c0_i32_0 = arith.constant 0 : i32
    %c0_i32_1 = arith.constant 0 : i32
    return %arg0, %c0_i32, %c0_i32_0 : i32, i32, i32
  }
  func.func @transform_15(%arg0: i32) -> (i32, i32) {
    %c0_i32 = arith.constant 0 : i32
    %c0_i32_0 = arith.constant 0 : i32
    return %arg0, %c0_i32 : i32, i32
  }
}

</mosaic_0001>

<llo_original>
// kernel: tpu_custom_call.1
$region0: #{tpu_custom_call.1}
  #allocation0 [shape = 'u32[]', space=smem, size = 0x4, offset = 0x4, fixed_abs, tag = 'smem constant byte address 0x4 - core index']
  #allocation1 [shape = 'u32[144,128]{1,0:T(1,128)}', space=vmem, size = 0x12000, scoped, tag = 'internal scratch']
  %s0 = inlined_call_operand.vmem [shape: f32[2,8,16], index: 0, kind: input, shape index: {}]
  %s1 = inlined_call_operand.hbm [shape: f32[2,8,32], index: 1, kind: input, shape index: {}]
  %s2 = inlined_call_operand.hbm [shape: f32[16,64], index: 2, kind: input, shape index: {}]
  %s3 = inlined_call_operand.vmem [shape: f32[1,64], index: 3, kind: input, shape index: {}]
  %s4 = inlined_call_operand.vmem [shape: f32[32,32], index: 4, kind: input, shape index: {}]
  %s5 = inlined_call_operand.vmem [shape: f32[1,32], index: 5, kind: input, shape index: {}]
  %s6 = inlined_call_operand.vmem [shape: f32[32,16], index: 6, kind: input, shape index: {}]
  %s7 = inlined_call_operand.vmem [shape: f32[1,16], index: 7, kind: input, shape index: {}]
  %s8 = inlined_call_operand.vmem [shape: f32[1,32], index: 8, kind: input, shape index: {}]
  %s9 = inlined_call_operand.vmem [shape: f32[1,32], index: 9, kind: input, shape index: {}]
  %s10 = inlined_call_operand.vmem [shape: f32[1,64], index: 10, kind: input, shape index: {}]
  %s11 = inlined_call_operand.vmem [shape: f32[1,64], index: 11, kind: input, shape index: {}]
  %s12 = inlined_call_operand.vmem [shape: f32[1,128], index: 12, kind: input, shape index: {}]
  %s13 = inlined_call_operand.vmem [shape: f32[1,128], index: 13, kind: input, shape index: {}]
  %s14 = inlined_call_operand.hbm [shape: f32[2,8,64], index: 14, kind: output, shape index: {0}]
  %s15 = inlined_call_operand.hbm [shape: f32[8,128], index: 15, kind: output, shape index: {1}]
  %16 = xla_tuple %s14, %s15
  %s17 = sld [smem:[#allocation0]]
  $region82: #{tpu_custom_call.1} parent=0
    _
  %s19 = ssub.s32 1, %s17
  %s20 = scalar_select 0, %s19, %s17
  $region1: #{tpu_custom_call.1} parent=0
    #allocation2 [shape = 'u8[8192]{0}', space=vmem, size = 0x2000, scoped, tag = 'input window, operand 1, single buffered']
    #allocation3 [shape = 's32[1]{0}', space=sflag, size = 0x4, scoped, tag = 'scoped memory for tpu_custom_call.1']
    #allocation4 [shape = 's32[1]{0}', space=sflag, size = 0x4, scoped, tag = 'scoped memory for tpu_custom_call.1']
    #allocation5 [shape = 'u8[8192]{0}', space=vmem, size = 0x2000, scoped, tag = 'input window, operand 2, single buffered']
    #allocation6 [shape = 's32[1]{0}', space=sflag, size = 0x4, scoped, tag = 'scoped memory for tpu_custom_call.1']
    #allocation7 [shape = 'u8[8192]{0}', space=vmem, size = 0x2000, scoped, tag = 'output window, operand 0, single buffered']
    #allocation8 [shape = 'u8[4096]{0}', space=vmem, size = 0x1000, scoped, tag = 'output window, operand 1, single buffered']
    #allocation9 [shape = 's32[1]{0}', space=sflag, size = 0x4, scoped, tag = 'scoped memory for tpu_custom_call.1']
    %21 = vsyncpa [#allocation3], 0
    %22 = vsyncpa [#allocation6], 0
    %23 = vsyncpa [#allocation4], 0
    %24 = vsyncpa [#allocation9], 0
    // Predicated region
    $region2: #{tpu_custom_call.1} parent=1 // pred_check
      _
    $region3: #{tpu_custom_call.1} parent=1 // pred_check_branch
      %26 = sbr.rel (0) target = $region5
    $region4: #{tpu_custom_call.1} parent=1 // pred_region
      _
    $region5: #{tpu_custom_call.1} parent=1 // pred_fallthru
      _
    // Predicated region
    $region6: #{tpu_custom_call.1} parent=1 // pred_check
      _
    $region7: #{tpu_custom_call.1} parent=1 // pred_check_branch
      %28 = sbr.rel (0) target = $region9
    $region8: #{tpu_custom_call.1} parent=1 // pred_region
      %s30 = ssub.s32 256, 256
      %31 = vsyncadd [#allocation3], %s30
      %s32 = sshll.u32 [#allocation2], 4
      %s33 = int_to_ptr.vmem [resolvable:$true] %s32
      %38 = dma.hbm_to_vmem [thread:$0]  %s1, 256, %s33, [#allocation3], 128, 128, 8
    $region9: #{tpu_custom_call.1} parent=1 // pred_fallthru
      _
    // Predicated region
    $region10: #{tpu_custom_call.1} parent=1 // pred_check
      _
    $region11: #{tpu_custom_call.1} parent=1 // pred_check_branch
      %40 = sbr.rel (0) target = $region13
    $region12: #{tpu_custom_call.1} parent=1 // pred_region
      %s42 = ssub.s32 256, 256
      %43 = vsyncadd [#allocation6], %s42
      %s44 = sshll.u32 [#allocation5], 4
      %s45 = int_to_ptr.vmem [resolvable:$true] %s44
      %50 = dma.hbm_to_vmem [thread:$0]  %s2, 256, %s45, [#allocation6], 128, 128, 8
    $region13: #{tpu_custom_call.1} parent=1 // pred_fallthru
      _
    // Predicated region
    $region14: #{tpu_custom_call.1} parent=1 // pred_check
      _
    $region15: #{tpu_custom_call.1} parent=1 // pred_check_branch
      %52 = sbr.rel (0) target = $region17
    $region16: #{tpu_custom_call.1} parent=1 // pred_region
      _
    $region17: #{tpu_custom_call.1} parent=1 // pred_fallthru
      _
    // Predicated region
    $region18: #{tpu_custom_call.1} parent=1 // pred_check
      _
    $region19: #{tpu_custom_call.1} parent=1 // pred_check_branch
      %54 = sbr.rel (0) target = $region21
    $region20: #{tpu_custom_call.1} parent=1 // pred_region
      _
    $region21: #{tpu_custom_call.1} parent=1 // pred_fallthru
      _
    // Predicated region
    $region22: #{tpu_custom_call.1} parent=1 // pred_check
      _
    $region23: #{tpu_custom_call.1} parent=1 // pred_check_branch
      %56 = sbr.rel (0) target = $region25
    $region24: #{tpu_custom_call.1} parent=1 // pred_region
      _
    $region25: #{tpu_custom_call.1} parent=1 // pred_fallthru
      _
    // Predicated region
    $region26: #{tpu_custom_call.1} parent=1 // pred_check
      _
    $region27: #{tpu_custom_call.1} parent=1 // pred_check_branch
      %58 = sbr.rel (0) target = $region29
    $region28: #{tpu_custom_call.1} parent=1 // pred_region
      _
    $region29: #{tpu_custom_call.1} parent=1 // pred_fallthru
      _
    // Predicated region
    $region30: #{tpu_custom_call.1} parent=1 // pred_check
      _
    $region31: #{tpu_custom_call.1} parent=1 // pred_check_branch
      %60 = sbr.rel (0) target = $region33
    $region32: #{tpu_custom_call.1} parent=1 // pred_region
      _
    $region33: #{tpu_custom_call.1} parent=1 // pred_fallthru
      _
    // Predicated region
    $region34: #{tpu_custom_call.1} parent=1 // pred_check
      _
    $region35: #{tpu_custom_call.1} parent=1 // pred_check_branch
      %62 = sbr.rel (0) target = $region37
    $region36: #{tpu_custom_call.1} parent=1 // pred_region
      _
    $region37: #{tpu_custom_call.1} parent=1 // pred_fallthru
      _
    // Predicated region
    $region38: #{tpu_custom_call.1} parent=1 // pred_check
      _
    $region39: #{tpu_custom_call.1} parent=1 // pred_check_branch
      %64 = sbr.rel (0) target = $region41
    $region40: #{tpu_custom_call.1} parent=1 // pred_region
      _
    $region41: #{tpu_custom_call.1} parent=1 // pred_fallthru
      _
    // Predicated region
    $region42: #{tpu_custom_call.1} parent=1 // pred_check
      _
    $region43: #{tpu_custom_call.1} parent=1 // pred_check_branch
      %66 = sbr.rel (0) target = $region45
    $region44: #{tpu_custom_call.1} parent=1 // pred_region
      _
    $region45: #{tpu_custom_call.1} parent=1 // pred_fallthru
      _
    // Predicated region
    $region46: #{tpu_custom_call.1} parent=1 // pred_check
      _
    $region47: #{tpu_custom_call.1} parent=1 // pred_check_branch
      %68 = sbr.rel (0) target = $region49
    $region48: #{tpu_custom_call.1} parent=1 // pred_region
      _
    $region49: #{tpu_custom_call.1} parent=1 // pred_fallthru
      _
    // Predicated region
    $region50: #{tpu_custom_call.1} parent=1 // pred_check
      _
    $region51: #{tpu_custom_call.1} parent=1 // pred_check_branch
      %70 = sbr.rel (0) target = $region53
    $region52: #{tpu_custom_call.1} parent=1 // pred_region
      _
    $region53: #{tpu_custom_call.1} parent=1 // pred_fallthru
      _
    // Predicated region
    $region54: #{tpu_custom_call.1} parent=1 // pred_check
      _
    $region55: #{tpu_custom_call.1} parent=1 // pred_check_branch
      %72 = sbr.rel (0) target = $region57
    $region56: #{tpu_custom_call.1} parent=1 // pred_region
      _
    $region57: #{tpu_custom_call.1} parent=1 // pred_fallthru
      _
    // Predicated region
    $region58: #{tpu_custom_call.1} parent=1 // pred_check
      _
    $region59: #{tpu_custom_call.1} parent=1 // pred_check_branch
      %74 = sbr.rel (0) target = $region61
    $region60: #{tpu_custom_call.1} parent=1 // pred_region
      %75 = dma.done [#allocation3], 256
    $region61: #{tpu_custom_call.1} parent=1 // pred_fallthru
      _
    // Predicated region
    $region62: #{tpu_custom_call.1} parent=1 // pred_check
      _
    $region63: #{tpu_custom_call.1} parent=1 // pred_check_branch
      %77 = sbr.rel (0) target = $region65
    $region64: #{tpu_custom_call.1} parent=1 // pred_region
      %78 = dma.done [#allocation6], 256
    $region65: #{tpu_custom_call.1} parent=1 // pred_fallthru
      _
    %v79 = vld [vmem:[%s0] sm:$0xff]
    %v80 = vld [vmem:[%s0 + $0x8] sm:$0xff]
    %v81 = vld [vmem:[#allocation5] sm:$0xff]
    %v82 = vld [vmem:[#allocation5 + $0x8] sm:$0xff]
    %v83 = vld [vmem:[%s3] sm:$0x1]
    %v85 = vlaneseq
    %v86 = vshrl.u32 %v85, 7
    %v87 = vsub.s32 0, %v86
    %v88 = vrot.slane %v83, %v87
    %vm90 = vcmask 130048
    %v92 = vsel %vm90, %v79, 0
    %v95 = vsel %vm90, %v80, 0
    %97 = vmatprep.subr.mxu0 0.0
    %98 = vmatpush1.msra.mxu0 %v81
    %99 = vmatprep.subr.mxu0 0.0
    %100 = vmatpush1.msra.mxu0 %v82
    %101 = vmatprep.subr.mxu0 0.0
    %102 = vmatpush1.msra.mxu0 0.0
    %103 = vmatprep.subr.mxu0 0.0
    %104 = vmatpush1.msra.mxu0 0.0
    %105 = vmatprep.subr.mxu0 0.0
    %106 = vmatpush1.msra.mxu0 0.0
    %107 = vmatprep.subr.mxu0 0.0
    %108 = vmatpush1.msra.mxu0 0.0
    %109 = vmatprep.subr.mxu0 0.0
    %110 = vmatpush1.msra.mxu0 0.0
    %111 = vmatprep.subr.mxu0 0.0
    %112 = vmatpush1.msra.mxu0 0.0
    %113 = vmatprep.subr.mxu0 0.0
    %114 = vmatpush1.msra.mxu0 0.0
    %115 = vmatprep.subr.mxu0 0.0
    %116 = vmatpush1.msra.mxu0 0.0
    %117 = vmatprep.subr.mxu0 0.0
    %118 = vmatpush1.msra.mxu0 0.0
    %119 = vmatprep.subr.mxu0 0.0
    %120 = vmatpush1.msra.mxu0 0.0
    %121 = vmatprep.subr.mxu0 0.0
    %122 = vmatpush1.msra.mxu0 0.0
    %123 = vmatprep.subr.mxu0 0.0
    %124 = vmatpush1.msra.mxu0 0.0
    %125 = vmatprep.subr.mxu0 0.0
    %126 = vmatpush1.msra.mxu0 0.0
    %127 = vmatprep.subr.mxu0 0.0
    %128 = vmatpush1.msra.mxu0 0.0
    %129 = vmatprep.subr.mxu0 0.0
    %130 = vmatpush1.msra.mxu0 0.0
    %131 = vmatprep.subr.mxu0 0.0
    %132 = vmatpush1.msra.mxu0 0.0
    %133 = vmatprep.subr.mxu0 0.0
    %134 = vmatpush1.msra.mxu0 0.0
    %135 = vmatprep.subr.mxu0 0.0
    %136 = vmatpush1.msra.mxu0 0.0
    %137 = vmatprep.subr.mxu0 0.0
    %138 = vmatpush1.msra.mxu0 0.0
    %139 = vmatprep.subr.mxu0 0.0
    %140 = vmatpush1.msra.mxu0 0.0
    %141 = vmatprep.subr.mxu0 0.0
    %142 = vmatpush1.msra.mxu0 0.0
    %143 = vmatprep.subr.mxu0 0.0
    %144 = vmatpush1.msra.mxu0 0.0
    %145 = vmatprep.subr.mxu0 0.0
    %146 = vmatpush1.msra.mxu0 0.0
    %147 = vmatprep.subr.mxu0 0.0
    %148 = vmatpush1.msra.mxu0 0.0
    %149 = vmatprep.subr.mxu0 0.0
    %150 = vmatpush1.msra.mxu0 0.0
    %151 = vmatprep.subr.mxu0 0.0
    %152 = vmatpush1.msra.mxu0 0.0
    %153 = vmatprep.subr.mxu0 0.0
    %154 = vmatpush1.msra.mxu0 0.0
    %155 = vmatprep.subr.mxu0 0.0
    %156 = vmatpush1.msra.mxu0 0.0
    %157 = vmatprep.subr.mxu0 0.0
    %158 = vmatpush1.msra.mxu0 0.0
    %159 = vmatprep.subr.mxu0 0.0
    %160 = vmatpush1.msra.mxu0 0.0
    %161 = vmatprep.mubr.f32.mxu0 0.0
    %162 = vmatmul.mubr.f32.gmra.mrb[0].mxu0 %v92
    %v163 = vpop.f32.mrb[0].mxu0
    %v164 = vadd.f32 %v88, %v163
    %v165 = vpop.f32.mrb[0].mxu0
    %166 = vmatprep.mubr.f32.mxu0 0.0
    %167 = vmatmul.mubr.f32.gmra.mrb[0].mxu0 %v95
    %v168 = vpop.f32.mrb[0].mxu0
    %v169 = vadd.f32 %v88, %v168
    %v170 = vpop.f32.mrb[0].mxu0
    %171 = vdwg.mxu0
    %v172 = vmax.f32 %v164, 0.0
    %v173 = vmax.f32 %v169, 0.0
    %v174 = vand.u32 2147483647, %v164
    %v175 = vand.u32 2147483647, %v169
    %v176 = vsub.f32 0.0, %v174
    %v177 = vsub.f32 0.0, %v175
    %v178 = vmul.f32 %v176, 1.442695
    %v179 = vpow.pop %v178
    %v180 = vmul.f32 %v177, 1.442695
    %v181 = vpow.pop %v180
    %v182 = vadd.f32 %v179, 1.0
    %v183 = vadd.f32 %v181, 1.0
    %v184 = vlog2.pop %v182
    %v185 = vmul.f32 %v184, 0.6931472
    %v186 = vlog2.pop %v183
    %v187 = vmul.f32 %v186, 0.6931472
    %v188 = vadd.f32 %v172, %v185
    %v189 = vadd.f32 %v173, %v187
    %v190 = vadd.f32 %v188, 0.0001
    %v191 = vadd.f32 %v189, 0.0001
    %v192 = vld [vmem:[%s4] sm:$0xff]
    %v193 = vld [vmem:[%s4 + $0x8] sm:$0xff]
    %v194 = vld [vmem:[%s4 + $0x10] sm:$0xff]
    %v195 = vld [vmem:[%s4 + $0x18] sm:$0xff]
    %v196 = vld [vmem:[%s5] sm:$0x1]
    %v198 = vlaneseq
    %v199 = vshrl.u32 %v198, 7
    %v200 = vsub.s32 0, %v199
    %v201 = vrot.slane %v196, %v200
    %vm203 = vcmask 261120
    %v205 = vsel %vm203, %v164, 0
    %v208 = vsel %vm203, %v169, 0
    %210 = vmatprep.subr.mxu0 0.0
    %211 = vmatpush1.msra.mxu0 %v192
    %212 = vmatprep.subr.mxu0 0.0
    %213 = vmatpush1.msra.mxu0 %v193
    %214 = vmatprep.subr.mxu0 0.0
    %215 = vmatpush1.msra.mxu0 %v194
    %216 = vmatprep.subr.mxu0 0.0
    %217 = vmatpush1.msra.mxu0 %v195
    %218 = vmatprep.subr.mxu0 0.0
    %219 = vmatpush1.msra.mxu0 0.0
    %220 = vmatprep.subr.mxu0 0.0
    %221 = vmatpush1.msra.mxu0 0.0
    %222 = vmatprep.subr.mxu0 0.0
    %223 = vmatpush1.msra.mxu0 0.0
    %224 = vmatprep.subr.mxu0 0.0
    %225 = vmatpush1.msra.mxu0 0.0
    %226 = vmatprep.subr.mxu0 0.0
    %227 = vmatpush1.msra.mxu0 0.0
    %228 = vmatprep.subr.mxu0 0.0
    %229 = vmatpush1.msra.mxu0 0.0
    %230 = vmatprep.subr.mxu0 0.0
    %231 = vmatpush1.msra.mxu0 0.0
    %232 = vmatprep.subr.mxu0 0.0
    %233 = vmatpush1.msra.mxu0 0.0
    %234 = vmatprep.subr.mxu0 0.0
    %235 = vmatpush1.msra.mxu0 0.0
    %236 = vmatprep.subr.mxu0 0.0
    %237 = vmatpush1.msra.mxu0 0.0
    %238 = vmatprep.subr.mxu0 0.0
    %239 = vmatpush1.msra.mxu0 0.0
    %240 = vmatprep.subr.mxu0 0.0
    %241 = vmatpush1.msra.mxu0 0.0
    %242 = vmatprep.subr.mxu0 0.0
    %243 = vmatpush1.msra.mxu0 0.0
    %244 = vmatprep.subr.mxu0 0.0
    %245 = vmatpush1.msra.mxu0 0.0
    %246 = vmatprep.subr.mxu0 0.0
    %247 = vmatpush1.msra.mxu0 0.0
    %248 = vmatprep.subr.mxu0 0.0
    %249 = vmatpush1.msra.mxu0 0.0
    %250 = vmatprep.subr.mxu0 0.0
    %251 = vmatpush1.msra.mxu0 0.0
    %252 = vmatprep.subr.mxu0 0.0
    %253 = vmatpush1.msra.mxu0 0.0
    %254 = vmatprep.subr.mxu0 0.0
    %255 = vmatpush1.msra.mxu0 0.0
    %256 = vmatprep.subr.mxu0 0.0
    %257 = vmatpush1.msra.mxu0 0.0
    %258 = vmatprep.subr.mxu0 0.0
    %259 = vmatpush1.msra.mxu0 0.0
    %260 = vmatprep.subr.mxu0 0.0
    %261 = vmatpush1.msra.mxu0 0.0
    %262 = vmatprep.subr.mxu0 0.0
    %263 = vmatpush1.msra.mxu0 0.0
    %264 = vmatprep.subr.mxu0 0.0
    %265 = vmatpush1.msra.mxu0 0.0
    %266 = vmatprep.subr.mxu0 0.0
    %267 = vmatpush1.msra.mxu0 0.0
    %268 = vmatprep.subr.mxu0 0.0
    %269 = vmatpush1.msra.mxu0 0.0
    %270 = vmatprep.subr.mxu0 0.0
    %271 = vmatpush1.msra.mxu0 0.0
    %272 = vmatprep.subr.mxu0 0.0
    %273 = vmatpush1.msra.mxu0 0.0
    %274 = vmatprep.mubr.f32.mxu0 0.0
    %275 = vmatmul.mubr.f32.gmra.mrb[0].mxu0 %v205
    %v276 = vpop.f32.mrb[0].mxu0
    %v277 = vadd.f32 %v201, %v276
    %v278 = vpop.f32.mrb[0].mxu0
    %279 = vmatprep.mubr.f32.mxu0 0.0
    %280 = vmatmul.mubr.f32.gmra.mrb[0].mxu0 %v208
    %v281 = vpop.f32.mrb[0].mxu0
    %v282 = vadd.f32 %v201, %v281
    %v283 = vpop.f32.mrb[0].mxu0
    %284 = vdwg.mxu0
    %v285 = vtanh.pop %v277
    %v286 = vtanh.pop %v282
    %v287 = vld [vmem:[%s6] sm:$0xff]
    %v288 = vld [vmem:[%s6 + $0x8] sm:$0xff]
    %v289 = vld [vmem:[%s6 + $0x10] sm:$0xff]
    %v290 = vld [vmem:[%s6 + $0x18] sm:$0xff]
    %v291 = vld [vmem:[%s7] sm:$0x1]
    %v293 = vlaneseq
    %v294 = vshrl.u32 %v293, 7
    %v295 = vsub.s32 0, %v294
    %v296 = vrot.slane %v291, %v295
    %v299 = vsel %vm203, %v285, 0
    %v302 = vsel %vm203, %v286, 0
    %304 = vmatprep.subr.mxu0 0.0
    %305 = vmatpush1.msra.mxu0 %v287
    %306 = vmatprep.subr.mxu0 0.0
    %307 = vmatpush1.msra.mxu0 %v288
    %308 = vmatprep.subr.mxu0 0.0
    %309 = vmatpush1.msra.mxu0 %v289
    %310 = vmatprep.subr.mxu0 0.0
    %311 = vmatpush1.msra.mxu0 %v290
    %312 = vmatprep.subr.mxu0 0.0
    %313 = vmatpush1.msra.mxu0 0.0
    %314 = vmatprep.subr.mxu0 0.0
    %315 = vmatpush1.msra.mxu0 0.0
    %316 = vmatprep.subr.mxu0 0.0
    %317 = vmatpush1.msra.mxu0 0.0
    %318 = vmatprep.subr.mxu0 0.0
    %319 = vmatpush1.msra.mxu0 0.0
    %320 = vmatprep.subr.mxu0 0.0
    %321 = vmatpush1.msra.mxu0 0.0
    %322 = vmatprep.subr.mxu0 0.0
    %323 = vmatpush1.msra.mxu0 0.0
    %324 = vmatprep.subr.mxu0 0.0
    %325 = vmatpush1.msra.mxu0 0.0
    %326 = vmatprep.subr.mxu0 0.0
    %327 = vmatpush1.msra.mxu0 0.0
    %328 = vmatprep.subr.mxu0 0.0
    %329 = vmatpush1.msra.mxu0 0.0
    %330 = vmatprep.subr.mxu0 0.0
    %331 = vmatpush1.msra.mxu0 0.0
    %332 = vmatprep.subr.mxu0 0.0
    %333 = vmatpush1.msra.mxu0 0.0
    %334 = vmatprep.subr.mxu0 0.0
    %335 = vmatpush1.msra.mxu0 0.0
    %336 = vmatprep.subr.mxu0 0.0
    %337 = vmatpush1.msra.mxu0 0.0
    %338 = vmatprep.subr.mxu0 0.0
    %339 = vmatpush1.msra.mxu0 0.0
    %340 = vmatprep.subr.mxu0 0.0
    %341 = vmatpush1.msra.mxu0 0.0
    %342 = vmatprep.subr.mxu0 0.0
    %343 = vmatpush1.msra.mxu0 0.0
    %344 = vmatprep.subr.mxu0 0.0
    %345 = vmatpush1.msra.mxu0 0.0
    %346 = vmatprep.subr.mxu0 0.0
    %347 = vmatpush1.msra.mxu0 0.0
    %348 = vmatprep.subr.mxu0 0.0
    %349 = vmatpush1.msra.mxu0 0.0
    %350 = vmatprep.subr.mxu0 0.0
    %351 = vmatpush1.msra.mxu0 0.0
    %352 = vmatprep.subr.mxu0 0.0
    %353 = vmatpush1.msra.mxu0 0.0
    %354 = vmatprep.subr.mxu0 0.0
    %355 = vmatpush1.msra.mxu0 0.0
    %356 = vmatprep.subr.mxu0 0.0
    %357 = vmatpush1.msra.mxu0 0.0
    %358 = vmatprep.subr.mxu0 0.0
    %359 = vmatpush1.msra.mxu0 0.0
    %360 = vmatprep.subr.mxu0 0.0
    %361 = vmatpush1.msra.mxu0 0.0
    %362 = vmatprep.subr.mxu0 0.0
    %363 = vmatpush1.msra.mxu0 0.0
    %364 = vmatprep.subr.mxu0 0.0
    %365 = vmatpush1.msra.mxu0 0.0
    %366 = vmatprep.subr.mxu0 0.0
    %367 = vmatpush1.msra.mxu0 0.0
    %368 = vmatprep.mubr.f32.mxu0 0.0
    %369 = vmatmul.mubr.f32.gmra.mrb[0].mxu0 %v299
    %v370 = vpop.f32.mrb[0].mxu0
    %v371 = vadd.f32 %v296, %v370
    %v372 = vpop.f32.mrb[0].mxu0
    %373 = vmatprep.mubr.f32.mxu0 0.0
    %374 = vmatmul.mubr.f32.gmra.mrb[0].mxu0 %v302
    %v375 = vpop.f32.mrb[0].mxu0
    %v376 = vadd.f32 %v296, %v375
    %v377 = vpop.f32.mrb[0].mxu0
    %378 = vdwg.mxu0
    %v379 = vsub.f32 %v79, %v371
    %v380 = vsub.f32 %v80, %v376
    %v381 = vmul.f32 %v379, %v379
    %v382 = vmul.f32 %v380, %v380
    %v383 = vsel %vm90, %v381, 0.0
    %v384 = vsel %vm90, %v382, 0.0
    %v385 = vadd.f32 %v383, %v384
    %386 = vadd.xlane.f32.xlu0 %v385
    %v387 = vpop.xlane.xlu0 %386
    %v388 = vrot.slane %v387, 4
    %v389 = vadd.f32 %v387, %v388
    %v390 = vrot.slane %v389, 2
    %v391 = vadd.f32 %v389, %v390
    %v392 = vrot.slane %v391, 1
    %v393 = vadd.f32 %v391, %v392
    %s394 = vtos %v393
    %s395 = smul.f32 %s394, -50.0
    %s396 = sadd.f32 %s395, 354.21353
    %v397 = vld [vmem:[#allocation2] sm:$0xff]
    %v398 = vld [vmem:[#allocation2 + $0x8] sm:$0xff]
    %401 = vrot.lane.b32.xlu0 %v397, 32
    %v402 = vpop.permute.xlu0 %401
    %403 = vrot.lane.b32.xlu0 %v398, 32
    %v404 = vpop.permute.xlu0 %403
    %v407 = vmul.f32 %v190, %v402
    %v408 = vmul.f32 %v191, %v404
    %411 = vrot.lane.b32.xlu0 %v407, 96
    %v412 = vpop.permute.xlu0 %411
    %413 = vrot.lane.b32.xlu0 %v408, 96
    %v414 = vpop.permute.xlu0 %413
    %v417 = vadd.f32 %v164, %v412
    %v418 = vadd.f32 %v169, %v414
    %421 = vrot.lane.b32.xlu0 %v417, 32
    %v422 = vpop.permute.xlu0 %421
    %423 = vrot.lane.b32.xlu0 %v418, 32
    %v424 = vpop.permute.xlu0 %423
    %v427 = vsel %vm203, %v285, %v422
    %v428 = vsel %vm203, %v286, %v424
    %vm429 = vcmask 523264
    %430 = vst.msk [vmem:[#allocation7] sm:$0xff] %vm429, %v427
    %431 = vst.msk [vmem:[#allocation7 + $0x8] sm:$0xff] %vm429, %v428
    %v432 = vld [vmem:[%s8] sm:$0x1]
    %v433 = vld [vmem:[%s9] sm:$0x1]
    %v434 = vrcp.pop %v433
    %v435 = vmul.f32 1.0, %v434
    %v436 = vlog2.pop %v433
    %v437 = vmul.f32 %v436, 0.6931472
    %v438 = vlaneseq
    %v439 = vshrl.u32 %v438, 7
    %vm440 = vcmp.eq.s32.totalorder %v439, 0
    %vm441 = vcmp.lt.s32.totalorder %v439, 0
    %v442 = vsub.s32 0, %v439
    %v443 = vsel %vm441, %v442, %v439
    %v444 = vshrl.u32 %v443, 1
    %v445 = vand.u32 %v443, 1
    %v446 = vsub.s32 0, %v445
    %v447 = vsel %vm441, %v446, %v445
    %vm448 = vcmp.ne.s32.totalorder %v447, 0
    %vm449 = vcmp.lt.s32.totalorder %v447, 0
    %vm450 = vmand %vm449, %vm448
    %v451 = vadd.s32 %v447, 2
    %v452 = vsel %vm450, %v451, %v447
    %vm453 = vcmp.eq.s32.totalorder %v452, 0
    %v455 = vlaneseq
    %v456 = vshrl.u32 %v455, 7
    %v457 = vsub.s32 0, %v456
    %v458 = vrot.slane %v432, %v457
    %v460 = vsel %vm440, %v458, %v285
    %v461 = vsel %vm440, %v458, %v286
    %v463 = vlaneseq
    %v464 = vshrl.u32 %v463, 7
    %v465 = vsub.s32 0, %v464
    %v466 = vrot.slane %v435, %v465
    %v468 = vsel %vm440, %v466, 10.0
    %v470 = vlaneseq
    %v471 = vshrl.u32 %v470, 7
    %v472 = vsub.s32 0, %v471
    %v473 = vrot.slane %v437, %v472
    %v475 = vsel %vm440, %v473, -2.3025851
    %477 = vrot.lane.b32.xlu0 %v468, 32
    %v478 = vpop.permute.xlu0 %477
    %v480 = vmul.f32 %v190, %v478
    %v481 = vmul.f32 %v191, %v478
    %v482 = vmul.f32 %v480, %v480
    %v483 = vmul.f32 %v481, %v481
    %v484 = vsub.f32 %v460, %v164
    %v485 = vsub.f32 %v461, %v169
    %v486 = vmul.f32 %v484, %v468
    %v487 = vmul.f32 %v485, %v468
    %v488 = vmul.f32 %v486, %v486
    %v489 = vmul.f32 %v487, %v487
    %492 = vrot.lane.b32.xlu0 %v488, 32
    %v493 = vpop.permute.xlu0 %492
    %494 = vrot.lane.b32.xlu0 %v489, 32
    %v495 = vpop.permute.xlu0 %494
    %v498 = vadd.f32 %v482, %v493
    %v499 = vadd.f32 %v483, %v495
    %v500 = vlog2.pop %v190
    %v501 = vmul.f32 %v500, 0.6931472
    %v502 = vlog2.pop %v191
    %v503 = vmul.f32 %v502, 0.6931472
    %506 = vrot.lane.b32.xlu0 %v501, 96
    %v507 = vpop.permute.xlu0 %506
    %508 = vrot.lane.b32.xlu0 %v503, 96
    %v509 = vpop.permute.xlu0 %508
    %v512 = vsub.f32 %v475, %v507
    %v513 = vsub.f32 %v475, %v509
    %v514 = vmul.f32 %v512, 2.0
    %v515 = vmul.f32 %v513, 2.0
    %518 = vrot.lane.b32.xlu0 %v514, 32
    %v519 = vpop.permute.xlu0 %518
    %520 = vrot.lane.b32.xlu0 %v515, 32
    %v521 = vpop.permute.xlu0 %520
    %v524 = vadd.f32 %v498, %v519
    %v525 = vadd.f32 %v499, %v521
    %v526 = vsel %vm453, 0.7, 0.0
    %v527 = vsel %vm440, 1.0, %v526
    %v528 = vmul.f32 %v527, %v524
    %v529 = vmul.f32 %v527, %v525
    %532 = vrot.lane.b32.xlu0 %v528, 96
    %v533 = vpop.permute.xlu0 %532
    %534 = vrot.lane.b32.xlu0 %v529, 96
    %v535 = vpop.permute.xlu0 %534
    %v538 = vsel %vm203, %v533, 0.0
    %v539 = vsel %vm203, %v535, 0.0
    %v540 = vadd.f32 %v538, %v539
    %541 = vadd.xlane.f32.xlu0 %v540
    %v542 = vpop.xlane.xlu0 %541
    %v543 = vrot.slane %v542, 4
    %v544 = vadd.f32 %v542, %v543
    %v545 = vrot.slane %v544, 2
    %v546 = vadd.f32 %v544, %v545
    %v547 = vrot.slane %v546, 1
    %v548 = vadd.f32 %v546, %v547
    %s549 = vtos %v548
    %s550 = smul.f32 %s549, 0.5
    %s551 = sadd.f32 %s550, -99.2
    %v552 = vld [vmem:[%s10] sm:$0x1]
    %v553 = vld [vmem:[%s11] sm:$0x1]
    %v554 = vmul.f32 %v553, 2.0
    %v555 = vmul.f32 %v554, 1.442695
    %v556 = vpow.pop %v555
    %vm557 = vcmask 516096
    %v558 = vsel %vm557, %v556, 0.0
    %559 = vadd.xlane.f32.xlu0 %v558
    %v560 = vpop.xlane.xlu0 %559
    %v561 = vrot.slane %v560, 4
    %v562 = vadd.f32 %v560, %v561
    %v563 = vrot.slane %v562, 2
    %v564 = vadd.f32 %v562, %v563
    %v565 = vrot.slane %v564, 1
    %v566 = vadd.f32 %v564, %v565
    %s567 = vtos %v566
    %v568 = vsub.f32 0.0, %v552
    %v569 = vmul.f32 %v568, %v568
    %v570 = vsel %vm557, %v569, 0.0
    %571 = vadd.xlane.f32.xlu0 %v570
    %v572 = vpop.xlane.xlu0 %571
    %v573 = vrot.slane %v572, 4
    %v574 = vadd.f32 %v572, %v573
    %v575 = vrot.slane %v574, 2
    %v576 = vadd.f32 %v574, %v575
    %v577 = vrot.slane %v576, 1
    %v578 = vadd.f32 %v576, %v577
    %s579 = vtos %v578
    %v580 = vsel %vm557, %v553, 0.0
    %581 = vadd.xlane.f32.xlu0 %v580
    %v582 = vpop.xlane.xlu0 %581
    %v583 = vrot.slane %v582, 4
    %v584 = vadd.f32 %v582, %v583
    %v585 = vrot.slane %v584, 2
    %v586 = vadd.f32 %v584, %v585
    %v587 = vrot.slane %v586, 1
    %v588 = vadd.f32 %v586, %v587
    %s589 = vtos %v588
    %s590 = ssub.f32 0.0, %s589
    %s591 = smul.f32 %s590, 2.0
    %s592 = sadd.f32 %s567, %s579
    %s593 = sadd.f32 %s592, %s591
    %s594 = ssub.f32 %s593, 64.0
    %s595 = smul.f32 %s594, 0.5
    %v596 = vld [vmem:[%s12] sm:$0x1]
    %v597 = vld [vmem:[%s13] sm:$0x1]
    %v598 = vmul.f32 %v597, 2.0
    %v599 = vmul.f32 %v598, 1.442695
    %v600 = vpow.pop %v599
    %vm601 = vcmask 1040384
    %v602 = vsel %vm601, %v600, 0.0
    %603 = vadd.xlane.f32.xlu0 %v602
    %v604 = vpop.xlane.xlu0 %603
    %v605 = vrot.slane %v604, 4
    %v606 = vadd.f32 %v604, %v605
    %v607 = vrot.slane %v606, 2
    %v608 = vadd.f32 %v606, %v607
    %v609 = vrot.slane %v608, 1
    %v610 = vadd.f32 %v608, %v609
    %s611 = vtos %v610
    %v612 = vsub.f32 0.0, %v596
    %v613 = vmul.f32 %v612, %v612
    %v614 = vsel %vm601, %v613, 0.0
    %615 = vadd.xlane.f32.xlu0 %v614
    %v616 = vpop.xlane.xlu0 %615
    %v617 = vrot.slane %v616, 4
    %v618 = vadd.f32 %v616, %v617
    %v619 = vrot.slane %v618, 2
    %v620 = vadd.f32 %v618, %v619
    %v621 = vrot.slane %v620, 1
    %v622 = vadd.f32 %v620, %v621
    %s623 = vtos %v622
    %v624 = vsel %vm601, %v597, 0.0
    %625 = vadd.xlane.f32.xlu0 %v624
    %v626 = vpop.xlane.xlu0 %625
    %v627 = vrot.slane %v626, 4
    %v628 = vadd.f32 %v626, %v627
    %v629 = vrot.slane %v628, 2
    %v630 = vadd.f32 %v628, %v629
    %v631 = vrot.slane %v630, 1
    %v632 = vadd.f32 %v630, %v631
    %s633 = vtos %v632
    %s634 = ssub.f32 0.0, %s633
    %s635 = smul.f32 %s634, 2.0
    %s636 = sadd.f32 %s611, %s623
    %s637 = sadd.f32 %s636, %s635
    %s638 = ssub.f32 %s637, 128.0
    %s639 = smul.f32 %s638, 0.5
    %s640 = sadd.f32 %s595, %s639
    %p641 = scmp.eq.s32.totalorder 0, 0
    %s642 = scalar_select %p641, %s640, 0.0
    %v643 = vlaneseq
    %v644 = vand.u32 %v643, 127
    %vm645 = vcmp.eq.s32.totalorder %v644, 0
    %vm646 = vmand %vm440, %vm645
    %v647 = vstv %s396
    %v648 = vsel %vm646, %v647, 0.0
    %vm649 = vcmp.eq.s32.totalorder %v644, 1
    %vm650 = vmand %vm440, %vm649
    %v651 = vstv %s551
    %v652 = vsel %vm650, %v651, 0.0
    %v653 = vadd.f32 %v648, %v652
    %vm654 = vcmp.eq.s32.totalorder %v644, 2
    %vm655 = vmand %vm440, %vm654
    %v656 = vstv %s642
    %v657 = vsel %vm655, %v656, 0.0
    %v658 = vadd.f32 %v653, %v657
    %659 = vst [vmem:[#allocation8] sm:$0xff] %v658
    // Predicated region
    $region66: #{tpu_custom_call.1} parent=1 // pred_check
      _
    $region67: #{tpu_custom_call.1} parent=1 // pred_check_branch
      %661 = sbr.rel (0) target = $region69
    $region68: #{tpu_custom_call.1} parent=1 // pred_region
      %s663 = ssub.s32 256, 256
      %664 = vsyncadd [#allocation4], %s663
      %s665 = sshll.u32 [#allocation7], 4
      %s666 = int_to_ptr.vmem [resolvable:$true] %s665
      %671 = dma.vmem_to_hbm [thread:$0]  %s666, 256, %s14, [#allocation4], 128, 128, 8
    $region69: #{tpu_custom_call.1} parent=1 // pred_fallthru
      _
    // Predicated region
    $region70: #{tpu_custom_call.1} parent=1 // pred_check
      _
    $region71: #{tpu_custom_call.1} parent=1 // pred_check_branch
      %673 = sbr.rel (0) target = $region73
    $region72: #{tpu_custom_call.1} parent=1 // pred_region
      %s675 = ssub.s32 128, 128
      %676 = vsyncadd [#allocation9], %s675
      %s678 = sshll.u32 [#allocation8], 4
      %s679 = int_to_ptr.vmem [resolvable:$true] %s678
      %681 = dma.vmem_to_hbm [thread:$0]  %s679, 128, %s15, [#allocation9]
    $region73: #{tpu_custom_call.1} parent=1 // pred_fallthru
      _
    // Predicated region
    $region74: #{tpu_custom_call.1} parent=1 // pred_check
      _
    $region75: #{tpu_custom_call.1} parent=1 // pred_check_branch
      %683 = sbr.rel (0) target = $region77
    $region76: #{tpu_custom_call.1} parent=1 // pred_region
      %684 = dma.done [#allocation4], 256
    $region77: #{tpu_custom_call.1} parent=1 // pred_fallthru
      _
    // Predicated region
    $region78: #{tpu_custom_call.1} parent=1 // pred_check
      _
    $region79: #{tpu_custom_call.1} parent=1 // pred_check_branch
      %686 = sbr.rel (0) target = $region81
    $region80: #{tpu_custom_call.1} parent=1 // pred_region
      %687 = dma.done [#allocation9], 128
    $region81: #{tpu_custom_call.1} parent=1 // pred_fallthru
      _
    %688 = vsyncpa [#allocation3], 1
    %689 = vsyncpa [#allocation6], 1
    %690 = vsyncpa [#allocation4], 1
    %691 = vsyncpa [#allocation9], 1

</llo_original>
